<compile_context>
chip_gen: v5e
topology: v5e:2x2
jax: 0.10.0
libtpu: 0.0.40
codegen_flags: <defaults>
</compile_context>

<pallas_src>
import functools

import jax
import jax.numpy as jnp
from jax import lax
from jax.experimental import pallas as pl
from jax.experimental.pallas import tpu as pltpu

_LANES = 128
_SUBLANES = 8

# Inputs whose (VMEM-padded) footprint fits under this are handled by one fused
# single-dispatch kernel when beta != 0.
_FUSE_MAX_INPUT_BYTES = 4 << 20


# ---------------------------------------------------------------------------
# Helpers
# ---------------------------------------------------------------------------
def _round_up(x, m):
    return ((x + m - 1) // m) * m


def _as_2d(x):
    """Copy-free collapse of an N-D array to 2-D.

    Prefers a lane-dense (rows, 128) view when the element count allows it
    (row-major contiguous => free reshape), otherwise collapses the leading
    dims into rows.  No jnp.pad: a possibly-partial last row-tile is masked
    in-kernel instead, so no extra HBM traffic is generated."""
    if x.ndim == 0:
        x = x.reshape(1, 1)
    n = x.size
    if n % _LANES == 0:
        return x.reshape(n // _LANES, _LANES)
    return x.reshape(-1, x.shape[-1])


def _choose_tile_rows(n_rows, n_cols, target_bytes):
    """Largest row-tile (multiple of 8, or the full extent) whose VMEM-padded
    footprint is ~target_bytes."""
    c_pad = _round_up(n_cols, _LANES)
    rows = max(_SUBLANES, target_bytes // (c_pad * 4))
    rows = (rows // _SUBLANES) * _SUBLANES
    if rows >= n_rows:
        return n_rows               # full extent: always a legal block dim
    return rows


def _padded_vmem_bytes(shape2d):
    r, c = shape2d
    return _round_up(max(r, 1), _SUBLANES) * _round_up(max(c, 1), _LANES) * 4


def _multi_tensorcore_chip():
    """True for chips with >1 TensorCore (v7x / megacore).  Heuristic only —
    both code paths it selects between are correct."""
    try:
        kind = jax.devices()[0].device_kind.lower()
    except Exception:
        return False
    # v5e / v6e ("... lite") have a single TensorCore per chip.
    return not (("lite" in kind) or ("v5e" in kind) or ("v6e" in kind))


# ---------------------------------------------------------------------------
# Shared in-kernel pieces
# ---------------------------------------------------------------------------
def _smooth_l1_per_elem(b_ref, p_ref):
    d = b_ref[...].astype(jnp.float32) - p_ref[...].astype(jnp.float32)
    ad = jnp.abs(d)
    return jnp.where(ad < 1.0, 0.5 * d * d, ad - 0.5)


def _row_entropy(x):
    """Per-row entropy of Categorical(logits=x): H_i = log(s_i) - sum(ez*z)/s_i."""
    m = jnp.max(x, axis=-1, keepdims=True)
    z = x - m
    ez = jnp.exp(z)
    s = jnp.sum(ez, axis=-1, keepdims=True)
    # Exact reciprocal on purpose: approx=True EUP rcp may miss 1e-4 tolerance.
    return jnp.log(s) - jnp.sum(ez * z, axis=-1, keepdims=True) / s


def _emit_tile_sum(per, t, valid_rows, tile_rows, has_tail, sink):
    """Calls sink(v) with v = (1,1) sum of `per` over the valid rows of this
    tile.  The iota/compare/select row mask is only emitted for kernels that
    actually have a partial tail tile, and only executed on the last step."""
    if not has_tail:
        sink(jnp.sum(per, keepdims=True))
        return

    is_last = t == pl.num_programs(0) - 1

    @pl.when(jnp.logical_not(is_last))
    def _():
        sink(jnp.sum(per, keepdims=True))

    @pl.when(is_last)
    def _():
        # Out-of-range rows hold unspecified VMEM contents (possibly NaN/Inf);
        # the select (not a multiply-by-zero) discards them safely.
        rows_left = valid_rows - t * tile_rows
        rid = lax.broadcasted_iota(jnp.int32, per.shape, 0)
        sink(jnp.sum(jnp.where(rid < rows_left, per, 0.0), keepdims=True))


# ---------------------------------------------------------------------------
# SmoothL1Loss(reduction='mean', beta=1.0) on flattened bellman / pred
# ---------------------------------------------------------------------------
def _smooth_l1_partial_kernel(b_ref, p_ref, out_ref, *,
                              valid_rows, tile_rows, has_tail):
    t = pl.program_id(0)
    per = _smooth_l1_per_elem(b_ref, p_ref)

    def sink(v):
        out_ref[...] = v

    _emit_tile_sum(per, t, valid_rows, tile_rows, has_tail, sink)


def _smooth_l1_scalar_kernel(b_ref, p_ref, out_ref, acc_ref, *,
                             valid_rows, tile_rows, has_tail, inv_n):
    t = pl.program_id(0)

    @pl.when(t == 0)
    def _():
        acc_ref[...] = jnp.zeros_like(acc_ref)

    per = _smooth_l1_per_elem(b_ref, p_ref)

    def sink(v):
        acc_ref[...] = acc_ref[...] + v

    _emit_tile_sum(per, t, valid_rows, tile_rows, has_tail, sink)

    @pl.when(t == pl.num_programs(0) - 1)
    def _():
        out_ref[...] = acc_ref[...] * inv_n


def _smooth_l1_mean(bellman, pred, *, target_tile_bytes=2 << 20,
                    use_parallel_partials=None):
    n = bellman.size
    b2 = _as_2d(bellman)
    p2 = _as_2d(pred)
    rows, cols = b2.shape
    tile_rows = _choose_tile_rows(rows, cols, target_tile_bytes)
    grid = pl.cdiv(rows, tile_rows)
    has_tail = (rows % tile_rows) != 0
    if use_parallel_partials is None:
        use_parallel_partials = _multi_tensorcore_chip()

    in_specs = [pl.BlockSpec((tile_rows, cols), lambda t: (t, 0)),
                pl.BlockSpec((tile_rows, cols), lambda t: (t, 0))]

    if use_parallel_partials and grid > 1:
        # Per-tile partial sums; "parallel" axis lets multi-TC chips shard it.
        kernel = functools.partial(_smooth_l1_partial_kernel, valid_rows=rows,
                                   tile_rows=tile_rows, has_tail=has_tail)
        partials = pl.pallas_call(
            kernel,
            out_shape=jax.ShapeDtypeStruct((grid, 1), jnp.float32),
            grid=(grid,),
            in_specs=in_specs,
            out_specs=pl.BlockSpec((1, 1), lambda t: (t, 0)),
            compiler_params=pltpu.CompilerParams(
                dimension_semantics=("parallel",)),
        )(b2, p2)
        return jnp.sum(partials) / n

    # Single-TC chips (or a single tile): accumulate in VMEM and finalize
    # (cross-lane reduce + mean normalization) inside the kernel -> one
    # dispatch, one scalar output, no wrapper reduce.
    kernel = functools.partial(_smooth_l1_scalar_kernel, valid_rows=rows,
                               tile_rows=tile_rows, has_tail=has_tail,
                               inv_n=1.0 / n)
    out = pl.pallas_call(
        kernel,
        out_shape=jax.ShapeDtypeStruct((1, 1), jnp.float32),
        grid=(grid,),
        in_specs=in_specs,
        out_specs=pl.BlockSpec((1, 1), lambda t: (0, 0)),
        scratch_shapes=[pltpu.VMEM((1, 1), jnp.float32)],
        compiler_params=pltpu.CompilerParams(
            dimension_semantics=("arbitrary",)),
    )(b2, p2)
    return out[0, 0]


# ---------------------------------------------------------------------------
# -sum(Categorical(logits=network_pred).entropy())  (only built when beta != 0)
# ---------------------------------------------------------------------------
def _neg_entropy_partial_kernel(x_ref, out_ref, *, valid_rows, tile_rows, has_tail):
    t = pl.program_id(0)
    ent = _row_entropy(x_ref[...].astype(jnp.float32))   # (tile_rows, 1)

    def sink(v):
        out_ref[...] = -v

    _emit_tile_sum(ent, t, valid_rows, tile_rows, has_tail, sink)


def _neg_entropy_sum(logits, *, target_tile_bytes=1 << 20):
    x2 = logits.reshape(-1, logits.shape[-1])
    rows, cols = x2.shape
    tile_rows = _choose_tile_rows(rows, cols, target_tile_bytes)
    grid = pl.cdiv(rows, tile_rows)
    has_tail = (rows % tile_rows) != 0

    # TODO(synk): if profiling ever shows this kernel compute-bound with tiny
    # n_cat, route the two row sums through the idle MXU (dot with a ones
    # column); at current sizes it is HBM/dispatch-bound so not worth it.
    kernel = functools.partial(_neg_entropy_partial_kernel, valid_rows=rows,
                               tile_rows=tile_rows, has_tail=has_tail)
    partials = pl.pallas_call(
        kernel,
        out_shape=jax.ShapeDtypeStruct((grid, 1), jnp.float32),
        grid=(grid,),
        in_specs=[pl.BlockSpec((tile_rows, cols), lambda t: (t, 0))],
        out_specs=pl.BlockSpec((1, 1), lambda t: (t, 0)),
        compiler_params=pltpu.CompilerParams(
            dimension_semantics=("parallel",)),
    )(x2)
    if grid == 1:
        return partials[0, 0]
    return jnp.sum(partials)


# ---------------------------------------------------------------------------
# Fused single-dispatch path for small (typical DQN) inputs, beta != 0
# ---------------------------------------------------------------------------
def _fused_small_kernel(b_ref, p_ref, x_ref, out_ref, *, inv_n, beta):
    per = _smooth_l1_per_elem(b_ref, p_ref)
    dist = jnp.sum(per, keepdims=True) * inv_n
    ent = _row_entropy(x_ref[...].astype(jnp.float32))
    neg_entropy = -jnp.sum(ent, keepdims=True)
    out_ref[...] = dist + beta * neg_entropy


# ---------------------------------------------------------------------------
# Public wrapper == LossFunction(beta).forward(network_pred, bellman, pred)
# ---------------------------------------------------------------------------
def loss_function(network_pred, bellman, pred, *, beta=0.0):
    assert bellman.shape == pred.shape
    if beta == 0:
        # network_pred is never read (and never DMA'd) on this path.
        return _smooth_l1_mean(bellman, pred)

    b2 = _as_2d(bellman)
    p2 = _as_2d(pred)
    x2 = network_pred.reshape(-1, network_pred.shape[-1])
    footprint = 2 * _padded_vmem_bytes(b2.shape) + _padded_vmem_bytes(x2.shape)
    if footprint <= _FUSE_MAX_INPUT_BYTES:
        # Small inputs: one pallas_call, one dispatch, final scalar in-kernel.
        kernel = functools.partial(_fused_small_kernel,
                                   inv_n=1.0 / bellman.size, beta=float(beta))
        out = pl.pallas_call(
            kernel,
            out_shape=jax.ShapeDtypeStruct((1, 1), jnp.float32),
            grid=(1,),
            in_specs=[pl.BlockSpec(b2.shape, lambda i: (0, 0)),
                      pl.BlockSpec(p2.shape, lambda i: (0, 0)),
                      pl.BlockSpec(x2.shape, lambda i: (0, 0))],
            out_specs=pl.BlockSpec((1, 1), lambda i: (0, 0)),
        )(b2, p2, x2)
        return out[0, 0]

    dist_loss = _smooth_l1_mean(bellman, pred)
    entropy_loss = _neg_entropy_sum(network_pred)
    # TODO(synk): torch's Variable(..., requires_grad=True) detaches/rewires the
    # autograd graph; irrelevant for a forward-only kernel.
    return dist_loss + beta * entropy_loss


# ---------------------------------------------------------------------------
# Pure-JAX reference
# ---------------------------------------------------------------------------
def _neg_entropy_reference(logits):
    logp = jax.nn.log_softmax(logits.astype(jnp.float32), axis=-1)
    p = jnp.exp(logp)
    return jnp.sum(p * logp)          # == -sum(entropy)


def _loss_reference(network_pred, bellman, pred, *, beta=0.0):
    d = bellman.reshape(-1).astype(jnp.float32) - pred.reshape(-1).astype(jnp.float32)
    ad = jnp.abs(d)
    dist_loss = jnp.mean(jnp.where(ad < 1.0, 0.5 * d * d, ad - 0.5))
    if beta == 0:
        return dist_loss
    return dist_loss + beta * _neg_entropy_reference(network_pred)


if __name__ == "__main__":
    key = jax.random.PRNGKey(0)
    ks = jax.random.split(key, 8)

    # --- small DQN-sized shapes: fused path (beta!=0), single-dispatch scalar
    #     smooth-L1 path (beta==0) ---
    network_pred = jax.random.normal(ks[0], (4, 6), dtype=jnp.float32)
    bellman = jax.random.normal(ks[1], (2, 18), dtype=jnp.float32)
    pred = bellman + 0.5 * jax.random.normal(ks[2], (2, 18), dtype=jnp.float32)

    out0 = jax.block_until_ready(loss_function(network_pred, bellman, pred, beta=0.0))
    ref0 = _loss_reference(network_pred, bellman, pred, beta=0.0)
    assert jnp.allclose(out0, ref0, rtol=1e-4, atol=1e-4), (out0, ref0)

    out1 = jax.block_until_ready(loss_function(network_pred, bellman, pred, beta=0.01))
    ref1 = _loss_reference(network_pred, bellman, pred, beta=0.01)
    assert jnp.allclose(out1, ref1, rtol=1e-4, atol=1e-4), (out1, ref1)

    # --- medium shapes through the auto-gated public path ---
    network_pred2 = jax.random.normal(ks[3], (300, 33), dtype=jnp.float32)
    bellman2 = jax.random.normal(ks[4], (600, 160), dtype=jnp.float32)
    pred2 = bellman2 + 0.5 * jax.random.normal(ks[5], (600, 160), dtype=jnp.float32)

    out2 = jax.block_until_ready(
        loss_function(network_pred2, bellman2, pred2, beta=0.05))
    ref2 = _loss_reference(network_pred2, bellman2, pred2, beta=0.05)
    assert jnp.allclose(out2, ref2, rtol=1e-4, atol=1e-4), (out2, ref2)

    # --- non-fused split path (two kernels) for beta != 0 ---
    _orig_fuse = _FUSE_MAX_INPUT_BYTES
    _FUSE_MAX_INPUT_BYTES = 0
    out3 = jax.block_until_ready(
        loss_function(network_pred2, bellman2, pred2, beta=0.05))
    _FUSE_MAX_INPUT_BYTES = _orig_fuse
    assert jnp.allclose(out3, ref2, rtol=1e-4, atol=1e-4), (out3, ref2)

    # --- explicitly exercise every smooth-L1 variant: multi-tile grids, tail
    #     masking, parallel-partials and in-kernel-scalar modes ---
    ref_dist2 = _loss_reference(network_pred2, bellman2, pred2, beta=0.0)
    for parallel in (False, True):
        d = jax.block_until_ready(
            _smooth_l1_mean(bellman2, pred2, target_tile_bytes=64 << 10,
                            use_parallel_partials=parallel))
        assert jnp.allclose(d, ref_dist2, rtol=1e-4, atol=1e-4), (parallel, d, ref_dist2)

    # n % 128 != 0 with a multi-tile grid (masked tail rows, no padding copy)
    bellman3 = jax.random.normal(ks[6], (77, 33), dtype=jnp.float32)
    pred3 = bellman3 + 0.5 * jax.random.normal(ks[7], (77, 33), dtype=jnp.float32)
    ref_dist3 = _loss_reference(None, bellman3, pred3, beta=0.0)
    for parallel in (False, True):
        d = jax.block_until_ready(
            _smooth_l1_mean(bellman3, pred3, target_tile_bytes=8 << 10,
                            use_parallel_partials=parallel))
        assert jnp.allclose(d, ref_dist3, rtol=1e-4, atol=1e-4), (parallel, d, ref_dist3)

    # --- entropy kernel: multi-tile grid with masked partial last tile ---
    ref_ent2 = _neg_entropy_reference(network_pred2)
    e = jax.block_until_ready(
        _neg_entropy_sum(network_pred2, target_tile_bytes=16 << 10))
    assert jnp.allclose(e, ref_ent2, rtol=1e-4, atol=1e-4), (e, ref_ent2)

    print("KERNEL_OK")
</pallas_src>

<mosaic_0001>
module attributes {stable_mosaic.version = 11 : i64} {
  func.func @_smooth_l1_scalar_kernel(%arg0: i32, %arg1: memref<2x18xf32, #tpu.memory_space<vmem>>, %arg2: memref<2x18xf32, #tpu.memory_space<vmem>>, %arg3: memref<1x1xf32, #tpu.memory_space<vmem>>, %arg4: memref<1x1xf32, #tpu.memory_space<vmem>>) attributes {dimension_semantics = [#tpu.dimension_semantics<arbitrary>], iteration_bounds = array<i64: 1>, scalar_prefetch = 0 : i64, scratch_operands = 1 : i64, tpu.core_type = #tpu.core_type<tc>, window_params = [{transform_indices = @transform_0, window_bounds = array<i64: 2, 18>}, {transform_indices = @transform_1, window_bounds = array<i64: 2, 18>}, {pipeline_mode = #tpu.pipeline_mode<synchronous>, transform_indices = @transform_2, window_bounds = array<i64: 1, 1>}]} {
    %c0_i32 = arith.constant 0 : i32
    %0 = arith.cmpi eq, %arg0, %c0_i32 : i32
    %1 = arith.extui %0 : i1 to i32
    %c0_i32_0 = arith.constant 0 : i32
    %2 = arith.cmpi ne, %1, %c0_i32_0 : i32
    scf.if %2 {
      %cst_13 = arith.constant 0.000000e+00 : f32
      %26 = vector.broadcast %cst_13 : f32 to vector<1x1xf32>
      %c0_14 = arith.constant 0 : index
      %c0_15 = arith.constant 0 : index
      %27 = vector.load %arg4[%c0_14, %c0_15] : memref<1x1xf32, #tpu.memory_space<vmem>>, vector<1x1xf32>
      tpu.vector_store %arg4[%c0_14, %c0_15], %26 {strides = array<i32>} : memref<1x1xf32, #tpu.memory_space<vmem>>, vector<1x1xf32>,
    } else {
    }
    %c0 = arith.constant 0 : index
    %c0_1 = arith.constant 0 : index
    %3 = vector.load %arg1[%c0, %c0_1] : memref<2x18xf32, #tpu.memory_space<vmem>>, vector<2x18xf32>
    %c0_2 = arith.constant 0 : index
    %c0_3 = arith.constant 0 : index
    %4 = vector.load %arg2[%c0_2, %c0_3] : memref<2x18xf32, #tpu.memory_space<vmem>>, vector<2x18xf32>
    %5 = arith.subf %3, %4 : vector<2x18xf32>
    %6 = math.absf %5 : vector<2x18xf32>
    %cst = arith.constant 1.000000e+00 : f32
    %7 = vector.broadcast %cst : f32 to vector<2x18xf32>
    %8 = arith.cmpf olt, %6, %7 : vector<2x18xf32>
    %cst_4 = arith.constant 5.000000e-01 : f32
    %9 = vector.broadcast %cst_4 : f32 to vector<2x18xf32>
    %10 = arith.mulf %9, %5 : vector<2x18xf32>
    %11 = arith.mulf %10, %5 : vector<2x18xf32>
    %cst_5 = arith.constant 5.000000e-01 : f32
    %12 = vector.broadcast %cst_5 : f32 to vector<2x18xf32>
    %13 = arith.subf %6, %12 : vector<2x18xf32>
    %14 = arith.select %8, %11, %13 : vector<2x18xi1>, vector<2x18xf32>
    %15 = vector.shape_cast %14 : vector<2x18xf32> to vector<1x2x18xf32>
    %cst_6 = arith.constant dense<0.000000e+00> : vector<1xf32>
    %16 = vector.multi_reduction <add>, %15, %cst_6 [1, 2] : vector<1x2x18xf32> to vector<1xf32>
    %17 = vector.shape_cast %16 : vector<1xf32> to vector<1x1x1xf32>
    %18 = vector.extract %17[0, 0, 0] : f32 from vector<1x1x1xf32>
    %19 = vector.broadcast %18 : f32 to vector<1x1xf32>
    %c0_7 = arith.constant 0 : index
    %c0_8 = arith.constant 0 : index
    %20 = vector.load %arg4[%c0_7, %c0_8] : memref<1x1xf32, #tpu.memory_space<vmem>>, vector<1x1xf32>
    %21 = arith.addf %20, %19 : vector<1x1xf32>
    %c0_9 = arith.constant 0 : index
    %c0_10 = arith.constant 0 : index
    %22 = vector.load %arg4[%c0_9, %c0_10] : memref<1x1xf32, #tpu.memory_space<vmem>>, vector<1x1xf32>
    tpu.vector_store %arg4[%c0_9, %c0_10], %21 {strides = array<i32>} : memref<1x1xf32, #tpu.memory_space<vmem>>, vector<1x1xf32>,
    %c0_i32_11 = arith.constant 0 : i32
    %23 = arith.cmpi eq, %arg0, %c0_i32_11 : i32
    %24 = arith.extui %23 : i1 to i32
    %c0_i32_12 = arith.constant 0 : i32
    %25 = arith.cmpi ne, %24, %c0_i32_12 : i32
    scf.if %25 {
      %c0_13 = arith.constant 0 : index
      %c0_14 = arith.constant 0 : index
      %26 = vector.load %arg4[%c0_13, %c0_14] : memref<1x1xf32, #tpu.memory_space<vmem>>, vector<1x1xf32>
      %cst_15 = arith.constant 0.027777778 : f32
      %27 = vector.broadcast %cst_15 : f32 to vector<1x1xf32>
      %28 = arith.mulf %26, %27 : vector<1x1xf32>
      %c0_16 = arith.constant 0 : index
      %c0_17 = arith.constant 0 : index
      %29 = vector.load %arg3[%c0_16, %c0_17] : memref<1x1xf32, #tpu.memory_space<vmem>>, vector<1x1xf32>
      tpu.vector_store %arg3[%c0_16, %c0_17], %28 {strides = array<i32>} : memref<1x1xf32, #tpu.memory_space<vmem>>, vector<1x1xf32>,
    } else {
    }
    return
  }
  func.func @transform_0(%arg0: i32) -> (i32, i32) {
    %c0_i32 = arith.constant 0 : i32
    %c0_i32_0 = arith.constant 0 : i32
    return %arg0, %c0_i32 : i32, i32
  }
  func.func @transform_1(%arg0: i32) -> (i32, i32) {
    %c0_i32 = arith.constant 0 : i32
    %c0_i32_0 = arith.constant 0 : i32
    return %arg0, %c0_i32 : i32, i32
  }
  func.func @transform_2(%arg0: i32) -> (i32, i32) {
    %c0_i32 = arith.constant 0 : i32
    %c0_i32_0 = arith.constant 0 : i32
    %c0_i32_1 = arith.constant 0 : i32
    return %c0_i32, %c0_i32_0 : i32, i32
  }
}

</mosaic_0001>

<llo_original>
// kernel: tpu_custom_call.1
$region0: #{tpu_custom_call.1}
  #allocation0 [shape = 'u32[]', space=smem, size = 0x4, offset = 0x4, fixed_abs, tag = 'smem constant byte address 0x4 - core index']
  #allocation1 [shape = 'u32[72,128]{1,0:T(1,128)}', space=vmem, size = 0x9000, scoped, tag = 'internal scratch']
  #allocation2 [shape = 'f32[1,1]{1,0:T(1,128)}', space=vmem, size = 0x200, scoped, tag = 'scratch operand']
  %s0 = inlined_call_operand.hbm [shape: f32[2,18], index: 0, kind: input, shape index: {}]
  %s1 = inlined_call_operand.hbm [shape: f32[2,18], index: 1, kind: input, shape index: {}]
  %s2 = inlined_call_operand.hbm [shape: f32[1,1], index: 2, kind: output, shape index: {}]
  %s3 = sld [smem:[#allocation0]]
  $region34: #{tpu_custom_call.1} parent=0
    _
  %s5 = ssub.s32 1, %s3
  %s6 = scalar_select 0, %s5, %s3
  $region1: #{tpu_custom_call.1} parent=0
    #allocation3 [shape = 'u8[1024]{0}', space=vmem, size = 0x400, scoped, tag = 'input window, operand 0, single buffered']
    #allocation4 [shape = 's32[1]{0}', space=sflag, size = 0x4, scoped, tag = 'scoped memory for tpu_custom_call.1']
    #allocation5 [shape = 's32[1]{0}', space=sflag, size = 0x4, scoped, tag = 'scoped memory for tpu_custom_call.1']
    #allocation6 [shape = 'u8[1024]{0}', space=vmem, size = 0x400, scoped, tag = 'input window, operand 1, single buffered']
    #allocation7 [shape = 's32[1]{0}', space=sflag, size = 0x4, scoped, tag = 'scoped memory for tpu_custom_call.1']
    #allocation8 [shape = 'u8[512]{0}', space=vmem, size = 0x400, scoped, tag = 'output window, operand 0, single buffered']
    %7 = vsyncpa [#allocation4], 0
    %8 = vsyncpa [#allocation7], 0
    %9 = vsyncpa [#allocation5], 0
    // Predicated region
    $region2: #{tpu_custom_call.1} parent=1 // pred_check
      _
    $region3: #{tpu_custom_call.1} parent=1 // pred_check_branch
      %11 = sbr.rel (0) target = $region5
    $region4: #{tpu_custom_call.1} parent=1 // pred_region
      %13 = vsyncadd [#allocation4], 0
      %s15 = sshll.u32 %s0, 4
      %s16 = int_to_ptr.hbm [resolvable:$true] %s15
      %s17 = sshll.u32 [#allocation3], 4
      %s18 = int_to_ptr.vmem [resolvable:$true] %s17
      %20 = dma.hbm_to_vmem [thread:$0]  %s16, 32, %s18, [#allocation4]
    $region5: #{tpu_custom_call.1} parent=1 // pred_fallthru
      _
    // Predicated region
    $region6: #{tpu_custom_call.1} parent=1 // pred_check
      _
    $region7: #{tpu_custom_call.1} parent=1 // pred_check_branch
      %22 = sbr.rel (0) target = $region9
    $region8: #{tpu_custom_call.1} parent=1 // pred_region
      %24 = vsyncadd [#allocation7], 0
      %s26 = sshll.u32 %s1, 4
      %s27 = int_to_ptr.hbm [resolvable:$true] %s26
      %s28 = sshll.u32 [#allocation6], 4
      %s29 = int_to_ptr.vmem [resolvable:$true] %s28
      %31 = dma.hbm_to_vmem [thread:$0]  %s27, 32, %s29, [#allocation7]
    $region9: #{tpu_custom_call.1} parent=1 // pred_fallthru
      _
    // Predicated region
    $region10: #{tpu_custom_call.1} parent=1 // pred_check
      _
    $region11: #{tpu_custom_call.1} parent=1 // pred_check_branch
      %33 = sbr.rel (0) target = $region13
    $region12: #{tpu_custom_call.1} parent=1 // pred_region
      %35 = dma.done [#allocation4], 32
    $region13: #{tpu_custom_call.1} parent=1 // pred_fallthru
      _
    // Predicated region
    $region14: #{tpu_custom_call.1} parent=1 // pred_check
      _
    $region15: #{tpu_custom_call.1} parent=1 // pred_check_branch
      %37 = sbr.rel (0) target = $region17
    $region16: #{tpu_custom_call.1} parent=1 // pred_region
      %39 = dma.done [#allocation7], 32
    $region17: #{tpu_custom_call.1} parent=1 // pred_fallthru
      _
    %p40 = scmp.eq.s32.totalorder 0, 0
    // Predicated region
    $region18: #{tpu_custom_call.1} parent=1 // pred_check
      %p41 = pneg %p40
    $region19: #{tpu_custom_call.1} parent=1 // pred_check_branch
      %43 = sbr.rel (%p41) target = $region21
    $region20: #{tpu_custom_call.1} parent=1 // pred_region
      %vm44 = vcmask 0
      %45 = vst.msk [vmem:[#allocation2] sm:$0x1] %vm44, 0.0
    $region21: #{tpu_custom_call.1} parent=1 // pred_fallthru
      _
    %v46 = vld [vmem:[#allocation3] sm:$0x3]
    %v47 = vld [vmem:[#allocation6] sm:$0x3]
    %v48 = vsub.f32 %v46, %v47
    %v49 = vand.u32 2147483647, %v48
    %vm50 = vcmp.lt.f32.partialorder %v49, 1.0
    %v51 = vmul.f32 %v48, 0.5
    %v52 = vmul.f32 %v51, %v48
    %v53 = vsub.f32 %v49, 0.5
    %v54 = vsel %vm50, %v52, %v53
    %vm55 = vcmask 140288
    %v56 = vsel %vm55, %v54, 0.0
    %57 = vadd.xlane.f32.xlu0 %v56
    %v58 = vpop.xlane.xlu0 %57
    %v59 = vrot.slane %v58, 4
    %v60 = vadd.f32 %v58, %v59
    %v61 = vrot.slane %v60, 2
    %v62 = vadd.f32 %v60, %v61
    %v63 = vrot.slane %v62, 1
    %v64 = vadd.f32 %v62, %v63
    %s65 = vtos %v64
    %v66 = vstv %s65
    %v67 = vld [vmem:[#allocation2] sm:$0x1]
    %v68 = vadd.f32 %v67, %v66
    %vm69 = vcmask 0
    %70 = vst.msk [vmem:[#allocation2] sm:$0x1] %vm69, %v68
    // Predicated region
    $region22: #{tpu_custom_call.1} parent=1 // pred_check
      %p71 = pneg %p40
    $region23: #{tpu_custom_call.1} parent=1 // pred_check_branch
      %73 = sbr.rel (%p71) target = $region25
    $region24: #{tpu_custom_call.1} parent=1 // pred_region
      %v74 = vld [vmem:[#allocation2] sm:$0x1]
      %v75 = vmul.f32 %v74, 0.027777778
      %76 = vst.msk [vmem:[#allocation8] sm:$0x1] %vm69, %v75
    $region25: #{tpu_custom_call.1} parent=1 // pred_fallthru
      _
    // Predicated region
    $region26: #{tpu_custom_call.1} parent=1 // pred_check
      _
    $region27: #{tpu_custom_call.1} parent=1 // pred_check_branch
      %78 = sbr.rel (0) target = $region29
    $region28: #{tpu_custom_call.1} parent=1 // pred_region
      %80 = vsyncadd [#allocation5], 0
      %s82 = sshll.u32 [#allocation8], 4
      %s83 = int_to_ptr.vmem [resolvable:$true] %s82
      %s84 = sshll.u32 %s2, 4
      %s85 = int_to_ptr.hbm [resolvable:$true] %s84
      %87 = dma.vmem_to_hbm [thread:$0]  %s83, 16, %s85, [#allocation5]
    $region29: #{tpu_custom_call.1} parent=1 // pred_fallthru
      _
    // Predicated region
    $region30: #{tpu_custom_call.1} parent=1 // pred_check
      _
    $region31: #{tpu_custom_call.1} parent=1 // pred_check_branch
      %89 = sbr.rel (0) target = $region33
    $region32: #{tpu_custom_call.1} parent=1 // pred_region
      %91 = dma.done [#allocation5], 16
    $region33: #{tpu_custom_call.1} parent=1 // pred_fallthru
      _
    %92 = vsyncpa [#allocation4], 1
    %93 = vsyncpa [#allocation7], 1
    %94 = vsyncpa [#allocation5], 1

</llo_original>
